<compile_context>
chip_gen: v6e
topology: v6e:2x2x1
jax: 0.10.0
libtpu: 0.0.40
codegen_flags: <defaults>
</compile_context>

<pallas_src>
import functools

import jax
import jax.numpy as jnp
from jax.experimental import pallas as pl
from jax.experimental.pallas import tpu as pltpu


def _round_up(n, m):
    return ((n + m - 1) // m) * m


def _round_down(n, m):
    return (n // m) * m


# ----------------- Pass 1: per-(batch, channel) sum & max over spatial -----------------

def _reduce_stats_kernel(x_ref, stats_ref, sum_sc, max_sc, *, s_true, t_s, ragged):
    """Accumulate per-channel sum/max across spatial tiles of one batch element.

    x_ref:     (C, tS)  current spatial tile (batch dim squeezed)
    stats_ref: (C, 2)   output: [:, 0] = sum, [:, 1] = max
    sum_sc:    (C, 1)   f32 running-sum scratch (resident across the spatial axis)
    max_sc:    (C, 1)   f32 running-max scratch
    """
    s = pl.program_id(1)
    n_s = pl.num_programs(1)

    @pl.when(s == 0)
    def _():
        sum_sc[...] = jnp.zeros_like(sum_sc)
        max_sc[...] = jnp.full_like(max_sc, -jnp.inf)

    x = x_ref[...].astype(jnp.float32)                       # (C, tS)

    def accumulate(x_sum, x_max):
        sum_sc[...] += jnp.sum(x_sum, axis=1, keepdims=True)
        max_sc[...] = jnp.maximum(max_sc[...],
                                  jnp.max(x_max, axis=1, keepdims=True))

    if ragged:
        # Interior tiles: fully valid -> no mask work at all.
        @pl.when(s < n_s - 1)
        def _():
            accumulate(x, x)

        # Ragged tail tile: OOB lanes of the boundary block are *unspecified*
        # (no wrapper padding anymore), so mask them out of BOTH sum and max.
        @pl.when(s == n_s - 1)
        def _():
            lane = jax.lax.broadcasted_iota(jnp.int32, x.shape, 1)
            valid = (s * t_s + lane) < s_true
            accumulate(jnp.where(valid, x, 0.0),
                       jnp.where(valid, x, -jnp.inf))
    else:
        accumulate(x, x)

    @pl.when(s == n_s - 1)
    def _():
        stats_ref[:, 0:1] = sum_sc[...]
        stats_ref[:, 1:2] = max_sc[...]


# ----------------- Pass 2: out tile = gate (C,1) * x tile (C,tS) -----------------

def _apply_gate_kernel(gate_ref, x_ref, o_ref):
    o_ref[...] = (gate_ref[...] * x_ref[...]).astype(o_ref.dtype)
    # OOB lanes of the ragged boundary block are dropped on store; no mask needed.


# ----------------- Wrapper -----------------

def channel_attention_f(x, w1, w2, *, lane_tile=None, block_bytes=2 * 1024 * 1024):
    """x: (B, C, D, H, W); w1: (C//r, C); w2: (C, C//r). Returns array of x's shape."""
    B, C, D, H, W = x.shape
    S = D * H * W

    x_flat = x.reshape(B, C, S)          # no padding, no copy

    # Lane-dense spatial tile chosen from a per-block VMEM byte budget
    # (~0.5-2 MiB blocks keep both HBM-bound passes near the roofline),
    # clamped so tiny inputs use a single block.
    if lane_tile is None:
        bytes_per_lane = C * x.dtype.itemsize
        t_s = max(128, _round_down(block_bytes // bytes_per_lane, 128))
    else:
        assert lane_tile % 128 == 0, "lane_tile must be a multiple of 128"
        t_s = lane_tile
    t_s = min(t_s, _round_up(S, 128))
    n_s = pl.cdiv(S, t_s)
    ragged = (S % t_s) != 0

    # Explicit scoped-VMEM limit: v5e defaults to 16 MiB; 32 MiB is safe on
    # v5e/v6e (128 MiB physical) and v7x (64 MiB physical).  Pass-2 working set
    # is ~4 * C * t_s * itemsize (double-buffered in + out), well under this.
    vmem_limit = 32 * 1024 * 1024

    # ---- Pass 1: streaming sum/max reduction over spatial tiles ----
    stats = pl.pallas_call(
        functools.partial(_reduce_stats_kernel, s_true=S, t_s=t_s, ragged=ragged),
        out_shape=jax.ShapeDtypeStruct((B, C, 2), jnp.float32),
        grid_spec=pltpu.PrefetchScalarGridSpec(
            num_scalar_prefetch=0,
            grid=(B, n_s),
            in_specs=[pl.BlockSpec((pl.Squeezed(), C, t_s), lambda b, s: (b, 0, s))],
            out_specs=pl.BlockSpec((pl.Squeezed(), C, 2), lambda b, s: (b, 0, 0)),
            scratch_shapes=[pltpu.VMEM((C, 1), jnp.float32),
                            pltpu.VMEM((C, 1), jnp.float32)],
        ),
        compiler_params=pltpu.CompilerParams(
            dimension_semantics=("parallel", "arbitrary"),
            vmem_limit_bytes=vmem_limit),
    )(x_flat)

    # ---- Tiny shared-MLP gate in plain JAX (once per (B, C); negligible work) ----
    avg = stats[..., 0] * jnp.float32(1.0 / S)                    # (B, C) true mean
    mx = stats[..., 1]                                            # (B, C)
    # fc2(relu(fc1(avg))) + fc2(relu(fc1(max))) == fc2(relu(fc1(avg)) + relu(fc1(max)))
    h = (jax.nn.relu(jnp.einsum("oc,bc->bo", w1, avg))
         + jax.nn.relu(jnp.einsum("oc,bc->bo", w1, mx)))          # (B, Cr)
    gate = jax.nn.sigmoid(jnp.einsum("co,bo->bc", w2, h))         # (B, C)
    gate = gate[..., None].astype(jnp.float32)                    # (B, C, 1)

    # ---- Pass 2: fully parallel, lane-dense gate * x multiply ----
    out_flat = pl.pallas_call(
        _apply_gate_kernel,
        out_shape=jax.ShapeDtypeStruct((B, C, S), x.dtype),
        grid_spec=pltpu.PrefetchScalarGridSpec(
            num_scalar_prefetch=0,
            grid=(B, n_s),
            in_specs=[pl.BlockSpec((pl.Squeezed(), C, 1), lambda b, s: (b, 0, 0)),
                      pl.BlockSpec((pl.Squeezed(), C, t_s), lambda b, s: (b, 0, s))],
            out_specs=pl.BlockSpec((pl.Squeezed(), C, t_s), lambda b, s: (b, 0, s)),
        ),
        compiler_params=pltpu.CompilerParams(
            dimension_semantics=("parallel", "parallel"),
            vmem_limit_bytes=vmem_limit),
    )(gate, x_flat)

    return out_flat.reshape(B, C, D, H, W)


# ----------------- Pure-JAX reference (mirrors the PyTorch forward) -----------------

def _reference(x, w1, w2):
    avg = jnp.mean(x, axis=(2, 3, 4))                             # (B, C)
    mx = jnp.max(x, axis=(2, 3, 4))                               # (B, C)

    def mlp(p):
        h = jnp.maximum(jnp.einsum("oc,bc->bo", w1, p), 0.0)
        return jnp.einsum("co,bo->bc", w2, h)

    gate = jax.nn.sigmoid(mlp(avg) + mlp(mx))                     # (B, C)
    return gate[:, :, None, None, None] * x


if __name__ == "__main__":
    # Shapes consistent with ChannelAttention_F(n_feats=16, ratio=8)
    C, ratio = 16, 8
    Cr = C // ratio

    key = jax.random.PRNGKey(0)
    kx1, kx2, k1, k2 = jax.random.split(key, 4)
    # 1x1x1 conv3d weights (bias=False) are plain matrices over channels.
    w1 = jax.random.normal(k1, (Cr, C), dtype=jnp.float32) * 0.1
    w2 = jax.random.normal(k2, (C, Cr), dtype=jnp.float32) * 0.1

    # Case 1: lane-aligned spatial size (D*H*W = 256 -> single tile, no mask path).
    x1 = jax.random.normal(kx1, (2, C, 4, 8, 8), dtype=jnp.float32)
    out1 = jax.block_until_ready(channel_attention_f(x1, w1, w2))
    ref1 = _reference(x1, w1, w2)
    assert out1.shape == x1.shape
    assert jnp.allclose(out1, ref1, atol=1e-5, rtol=1e-5), "mismatch (aligned case)"

    # Case 2: ragged spatial size (D*H*W = 450) with lane_tile=128 -> multiple
    # spatial tiles + unmasked interior tiles + masked ragged tail tile.
    x2 = jax.random.normal(kx2, (2, C, 5, 9, 10), dtype=jnp.float32)
    out2 = jax.block_until_ready(channel_attention_f(x2, w1, w2, lane_tile=128))
    ref2 = _reference(x2, w1, w2)
    assert out2.shape == x2.shape
    assert jnp.allclose(out2, ref2, atol=1e-5, rtol=1e-5), "mismatch (ragged case)"

    print("KERNEL_OK")
</pallas_src>

<mosaic_0001>
module attributes {stable_mosaic.version = 11 : i64} {
  func.func @_reduce_stats_kernel(%arg0: i32, %arg1: i32, %arg2: memref<1x16x256xf32, #tpu.memory_space<vmem>>, %arg3: memref<1x16x2xf32, #tpu.memory_space<vmem>>, %arg4: memref<16x1xf32, #tpu.memory_space<vmem>>, %arg5: memref<16x1xf32, #tpu.memory_space<vmem>>) attributes {dimension_semantics = [#tpu.dimension_semantics<parallel>, #tpu.dimension_semantics<arbitrary>], iteration_bounds = array<i64: 2, 1>, scalar_prefetch = 0 : i64, scratch_operands = 2 : i64, tpu.core_type = #tpu.core_type<tc>, window_params = [{transform_indices = @transform_0, window_bounds = array<i64: 1, 16, 256>}, {transform_indices = @transform_1, window_bounds = array<i64: 1, 16, 2>}]} {
    %c0_i32 = arith.constant 0 : i32
    %0 = arith.cmpi eq, %arg1, %c0_i32 : i32
    %1 = arith.extui %0 : i1 to i32
    %c0_i32_0 = arith.constant 0 : i32
    %2 = arith.cmpi ne, %1, %c0_i32_0 : i32
    scf.if %2 {
      %cst_14 = arith.constant 0.000000e+00 : f32
      %18 = vector.broadcast %cst_14 : f32 to vector<16x1xf32>
      %c0_15 = arith.constant 0 : index
      %c0_16 = arith.constant 0 : index
      %19 = vector.load %arg4[%c0_15, %c0_16] : memref<16x1xf32, #tpu.memory_space<vmem>>, vector<16x1xf32>
      tpu.vector_store %arg4[%c0_15, %c0_16], %18 {strides = array<i32>} : memref<16x1xf32, #tpu.memory_space<vmem>>, vector<16x1xf32>,
      %cst_17 = arith.constant 0xFF800000 : f32
      %20 = vector.broadcast %cst_17 : f32 to vector<16x1xf32>
      %c0_18 = arith.constant 0 : index
      %c0_19 = arith.constant 0 : index
      %21 = vector.load %arg5[%c0_18, %c0_19] : memref<16x1xf32, #tpu.memory_space<vmem>>, vector<16x1xf32>
      tpu.vector_store %arg5[%c0_18, %c0_19], %20 {strides = array<i32>} : memref<16x1xf32, #tpu.memory_space<vmem>>, vector<16x1xf32>,
    } else {
    }
    %c0 = arith.constant 0 : index
    %c0_1 = arith.constant 0 : index
    %c0_2 = arith.constant 0 : index
    %3 = vector.load %arg2[%c0, %c0_1, %c0_2] : memref<1x16x256xf32, #tpu.memory_space<vmem>>, vector<1x16x256xf32>
    %4 = vector.shape_cast %3 : vector<1x16x256xf32> to vector<16x256xf32>
    %c0_3 = arith.constant 0 : index
    %c0_4 = arith.constant 0 : index
    %5 = vector.load %arg4[%c0_3, %c0_4] : memref<16x1xf32, #tpu.memory_space<vmem>>, vector<16x1xf32>
    %cst = arith.constant dense<0.000000e+00> : vector<16xf32>
    %6 = vector.multi_reduction <add>, %4, %cst [1] : vector<16x256xf32> to vector<16xf32>
    %7 = vector.shape_cast %6 : vector<16xf32> to vector<16x1xf32>
    %8 = arith.addf %5, %7 : vector<16x1xf32>
    %c0_5 = arith.constant 0 : index
    %c0_6 = arith.constant 0 : index
    %9 = vector.load %arg4[%c0_5, %c0_6] : memref<16x1xf32, #tpu.memory_space<vmem>>, vector<16x1xf32>
    tpu.vector_store %arg4[%c0_5, %c0_6], %8 {strides = array<i32>} : memref<16x1xf32, #tpu.memory_space<vmem>>, vector<16x1xf32>,
    %c0_7 = arith.constant 0 : index
    %c0_8 = arith.constant 0 : index
    %10 = vector.load %arg5[%c0_7, %c0_8] : memref<16x1xf32, #tpu.memory_space<vmem>>, vector<16x1xf32>
    %cst_9 = arith.constant dense<0xFF800000> : vector<16xf32>
    %11 = vector.multi_reduction <maximumf>, %4, %cst_9 [1] : vector<16x256xf32> to vector<16xf32>
    %12 = vector.shape_cast %11 : vector<16xf32> to vector<16x1xf32>
    %13 = arith.maximumf %10, %12 : vector<16x1xf32>
    %c0_10 = arith.constant 0 : index
    %c0_11 = arith.constant 0 : index
    %14 = vector.load %arg5[%c0_10, %c0_11] : memref<16x1xf32, #tpu.memory_space<vmem>>, vector<16x1xf32>
    tpu.vector_store %arg5[%c0_10, %c0_11], %13 {strides = array<i32>} : memref<16x1xf32, #tpu.memory_space<vmem>>, vector<16x1xf32>,
    %c0_i32_12 = arith.constant 0 : i32
    %15 = arith.cmpi eq, %arg1, %c0_i32_12 : i32
    %16 = arith.extui %15 : i1 to i32
    %c0_i32_13 = arith.constant 0 : i32
    %17 = arith.cmpi ne, %16, %c0_i32_13 : i32
    scf.if %17 {
      %c0_14 = arith.constant 0 : index
      %c0_15 = arith.constant 0 : index
      %18 = vector.load %arg4[%c0_14, %c0_15] : memref<16x1xf32, #tpu.memory_space<vmem>>, vector<16x1xf32>
      %c0_16 = arith.constant 0 : index
      %c0_17 = arith.constant 0 : index
      %c0_18 = arith.constant 0 : index
      %19 = vector.load %arg3[%c0_16, %c0_17, %c0_18] : memref<1x16x2xf32, #tpu.memory_space<vmem>>, vector<1x16x1xf32>
      %20 = vector.shape_cast %19 : vector<1x16x1xf32> to vector<16x1xf32>
      %21 = vector.shape_cast %18 : vector<16x1xf32> to vector<1x16x1xf32>
      tpu.vector_store %arg3[%c0_16, %c0_17, %c0_18], %21 {strides = array<i32>} : memref<1x16x2xf32, #tpu.memory_space<vmem>>, vector<1x16x1xf32>,
      %c0_19 = arith.constant 0 : index
      %c0_20 = arith.constant 0 : index
      %22 = vector.load %arg5[%c0_19, %c0_20] : memref<16x1xf32, #tpu.memory_space<vmem>>, vector<16x1xf32>
      %c0_21 = arith.constant 0 : index
      %c0_22 = arith.constant 0 : index
      %c1 = arith.constant 1 : index
      %23 = vector.load %arg3[%c0_21, %c0_22, %c1] : memref<1x16x2xf32, #tpu.memory_space<vmem>>, vector<1x16x1xf32>
      %24 = vector.shape_cast %23 : vector<1x16x1xf32> to vector<16x1xf32>
      %25 = vector.shape_cast %22 : vector<16x1xf32> to vector<1x16x1xf32>
      tpu.vector_store %arg3[%c0_21, %c0_22, %c1], %25 {strides = array<i32>} : memref<1x16x2xf32, #tpu.memory_space<vmem>>, vector<1x16x1xf32>,
    } else {
    }
    return
  }
  func.func @transform_0(%arg0: i32, %arg1: i32) -> (i32, i32, i32) {
    %c0_i32 = arith.constant 0 : i32
    %c0_i32_0 = arith.constant 0 : i32
    return %arg0, %c0_i32, %arg1 : i32, i32, i32
  }
  func.func @transform_1(%arg0: i32, %arg1: i32) -> (i32, i32, i32) {
    %c0_i32 = arith.constant 0 : i32
    %c0_i32_0 = arith.constant 0 : i32
    %c0_i32_1 = arith.constant 0 : i32
    return %arg0, %c0_i32, %c0_i32_0 : i32, i32, i32
  }
}

</mosaic_0001>

<llo_original>
// kernel: tpu_custom_call.1
$region0: #{tpu_custom_call.1}
  #allocation0 [shape = 'u32[]', space=smem, size = 0x4, offset = 0x4, fixed_abs, tag = 'smem constant byte address 0x4 - core index']
  #allocation1 [shape = 'u32[144,128]{1,0:T(1,128)}', space=vmem, size = 0x12000, scoped, tag = 'internal scratch']
  #allocation2 [shape = 'f32[16,1]{1,0:T(8,128)}', space=vmem, size = 0x2000, scoped, tag = 'scratch operand']
  #allocation3 [shape = 'f32[16,1]{1,0:T(8,128)}', space=vmem, size = 0x2000, scoped, tag = 'scratch operand']
  %s0 = inlined_call_operand.hbm [shape: f32[2,16,256], index: 0, kind: input, shape index: {}]
  %s1 = inlined_call_operand.vmem [shape: f32[2,16,2], index: 1, kind: output, shape index: {}]
  %s2 = sld [smem:[#allocation0]]
  $region49: #{tpu_custom_call.1} parent=0
    _
  %s4 = ssub.s32 1, %s2
  %s5 = scalar_select 0, %s4, %s2
  $region1: #{tpu_custom_call.1} parent=0
    #allocation4 [shape = 'u8[32768]{0}', space=vmem, size = 0x8000, scoped, tag = 'input window, operand 0']
    #allocation5 [shape = 's32[2]{0}', space=sflag, size = 0x8, scoped, tag = 'scoped memory for tpu_custom_call.1']
    %6 = vsyncpa [#allocation5], 0
    %s7 = scalar_lea.sflag [#allocation5], 1
    %8 = vsyncpa %s7, 0
    loop: start=0, step=1, limit=4
    $region2: #{tpu_custom_call.1} parent=1 // loop_pre_header
      _
    $region3: #{tpu_custom_call.1} parent=1 // loop_header
      %s10 = sphi 0, %s14
      %p11 = scmp.ge.s32.totalorder %s10, 4
      %s17 = sphi 0, %s29
      %s18 = sphi 0, %s25
      %s19 = sphi 0, %s17
      %s20 = sphi 0, %s18
      %s21 = sphi 0, %s19
      %s22 = sphi 0, %s20
      %s34 = sphi 0, %s36
      %s37 = sphi 0, %s34
      %s38 = sphi 0, %s37
      %s54 = sphi 0, %s38
      %s60 = sphi 0, %s62
      %s63 = sphi 0, %s60
      %s64 = sphi 0, %s63
      %s80 = sphi 0, %s64
    $region4: #{tpu_custom_call.1} parent=1 // loop_header_branch
      %13 = sbr.rel (%p11) target = $region8
    $region5: #{tpu_custom_call.1} parent=1 // loop_body
      %s15 = ssub.s32 %s10, 1
      %s16 = ssub.s32 %s10, 2
      %s23 = sadd.s32 1, %s18
      %p24 = scmp.ge.s32.totalorder %s23, 1
      %s25 = scalar_select %p24, 0, %s23
      %s26 = sadd.s32 1, %s17
      %s27 = scalar_select %p24, %s26, %s17
      %p28 = scmp.ge.s32.totalorder %s27, 2
      %s29 = scalar_select %p28, 0, %s27
      %s30 = ssub.s32 %s17, %s29
      %s31 = ssub.s32 %s18, %s25
      %s32 = sor.u32 %s30, %s31
      %p33 = scmp.eq.s32.totalorder %s32, 0
      %s35 = sadd.s32 %s34, 1
      %s36 = scalar_select %p33, %s34, %s35
      %p39 = pneg %p33
      %p40 = scmp.eq.s32.totalorder %s10, 1
      %p41 = por %p39, %p40
      %p42 = scmp.ne.s32.totalorder %s34, %s37
      %p43 = scmp.eq.s32.totalorder %s10, 0
      %p44 = por %p42, %p43
      %p45 = scmp.ne.s32.totalorder %s34, %s37
      %p46 = scmp.eq.s32.totalorder %s15, 1
      %p47 = por %p45, %p46
      %p48 = scmp.ne.s32.totalorder %s37, %s38
      %p49 = scmp.eq.s32.totalorder %s15, 0
      %p50 = por %p48, %p49
      %p51 = scmp.ne.s32.totalorder %s37, %s38
      %p52 = scmp.eq.s32.totalorder %s16, 1
      %p53 = por %p51, %p52
      %p55 = scmp.ne.s32.totalorder %s38, %s54
      %p56 = scmp.eq.s32.totalorder %s16, 0
      %p57 = por %p55, %p56
      %s58 = ssub.s32 %s17, %s29
      %p59 = scmp.eq.s32.totalorder %s58, 0
      %s61 = sadd.s32 %s60, 1
      %s62 = scalar_select %p59, %s60, %s61
      %p65 = pneg %p59
      %p66 = scmp.eq.s32.totalorder %s10, 1
      %p67 = por %p65, %p66
      %p68 = scmp.ne.s32.totalorder %s60, %s63
      %p69 = scmp.eq.s32.totalorder %s10, 0
      %p70 = por %p68, %p69
      %p71 = scmp.ne.s32.totalorder %s60, %s63
      %p72 = scmp.eq.s32.totalorder %s15, 1
      %p73 = por %p71, %p72
      %p74 = scmp.ne.s32.totalorder %s63, %s64
      %p75 = scmp.eq.s32.totalorder %s15, 0
      %p76 = por %p74, %p75
      %p77 = scmp.ne.s32.totalorder %s63, %s64
      %p78 = scmp.eq.s32.totalorder %s16, 1
      %p79 = por %p77, %p78
      %p81 = scmp.ne.s32.totalorder %s64, %s80
      %p82 = scmp.eq.s32.totalorder %s16, 0
      %p83 = por %p81, %p82
      %p84 = scmp.le.s32.totalorder 1, %s10
      %p85 = scmp.lt.s32.totalorder %s10, 3
      %p86 = pnand %p84, %p85
      %p87 = pneg %p86
      // Predicated region
      $region9: #{tpu_custom_call.1} parent=5 // pred_check
        _
      $region10: #{tpu_custom_call.1} parent=5 // pred_check_branch
        %89 = sbr.rel (%p86) target = $region12
      $region11: #{tpu_custom_call.1} parent=5 // pred_region
        %s90 = ssub.s32 %s10, 1
      $region12: #{tpu_custom_call.1} parent=5 // pred_fallthru
        _
      %p91 = scmp.lt.s32.totalorder %s10, 2
      // Predicated region
      $region13: #{tpu_custom_call.1} parent=5 // pred_check
        %p92 = pneg %p91
      $region14: #{tpu_custom_call.1} parent=5 // pred_check_branch
        %94 = sbr.rel (%p92) target = $region16
      $region15: #{tpu_custom_call.1} parent=5 // pred_region
        // Predicated region
        $region17: #{tpu_custom_call.1} parent=15 // pred_check
          %p95 = pneg %p44
        $region18: #{tpu_custom_call.1} parent=15 // pred_check_branch
          %97 = sbr.rel (%p95) target = $region20
        $region19: #{tpu_custom_call.1} parent=15 // pred_region
          %s98 = sand.u32 %s34, 1
          %s99 = scalar_lea.sflag [#allocation5], %s98
          %s100 = sand.u32 %s34, 1
          %s101 = smul.addr %s100, 32
          %s102 = scalar_lea.vmem [#allocation4], %s101
          %s103 = smul.u32 2, %s18
          %s105 = ssub.s32 512, 512
          %106 = vsyncadd %s99, %s105
          %s107 = smul.addr %s17, 4
          %s108 = sadd.s32 %s103, %s107
          %s109 = smul.addr %s108, 128
          %s110 = scalar_lea.hbm %s0, %s109
          %s111 = sshll.u32 %s102, 4
          %s112 = int_to_ptr.vmem [resolvable:$true] %s111
          %117 = dma.hbm_to_vmem [thread:$0]  %s110, 512, %s112, %s99, 256, 256, 16
        $region20: #{tpu_custom_call.1} parent=15 // pred_fallthru
          _
      $region16: #{tpu_custom_call.1} parent=5 // pred_fallthru
        _
      %p118 = scmp.le.s32.totalorder 1, %s10
      %p119 = scmp.lt.s32.totalorder %s10, 3
      %p120 = pnand %p118, %p119
      %p121 = pneg %p120
      // Predicated region
      $region21: #{tpu_custom_call.1} parent=5 // pred_check
        _
      $region22: #{tpu_custom_call.1} parent=5 // pred_check_branch
        %123 = sbr.rel (%p120) target = $region24
      $region23: #{tpu_custom_call.1} parent=5 // pred_region
        %s124 = ssub.s32 %s10, 1
        %s125 = sand.u32 %s37, 1
        %s126 = scalar_lea.sflag [#allocation5], %s125
        %s127 = sand.u32 %s37, 1
        %s128 = smul.addr %s127, 32
        %s129 = scalar_lea.vmem [#allocation4], %s128
        // Predicated region
        $region25: #{tpu_custom_call.1} parent=23 // pred_check
          %p130 = pneg %p50
        $region26: #{tpu_custom_call.1} parent=23 // pred_check_branch
          %132 = sbr.rel (%p130) target = $region28
        $region27: #{tpu_custom_call.1} parent=23 // pred_region
          %133 = dma.done %s126, 512
        $region28: #{tpu_custom_call.1} parent=23 // pred_fallthru
          _
        %s134 = sand.u32 %s37, 1
        %s135 = scalar_lea.sflag [#allocation5], %s134
        %s136 = sand.u32 %s37, 1
        %s137 = smul.addr %s136, 32
        %s138 = scalar_lea.vmem [#allocation4], %s137
        %p139 = pneg %p50
        %p140 = pneg %p47
        %p141 = pneg %p76
        %p142 = pneg %p73
        %p143 = scmp.lt.s32.totalorder %s19, 1
        %s144 = scalar_select %p143, %s19, 1
        %s145 = smul.addr %s144, 2
        %s146 = smul.addr %s145, 8
        %s147 = scalar_lea.vmem %s1, %s146
        %s148 = smul.u32 2, %s20
        %p149 = scmp.lt.s32.totalorder %s19, 1
        %s150 = scalar_select %p149, %s19, 1
        %s151 = smul.addr %s150, 2
        %s152 = smul.addr %s151, 8
        %s153 = scalar_lea.vmem %s1, %s152
        %p154 = scmp.eq.s32.totalorder %s20, 0
        // Predicated region
        $region29: #{tpu_custom_call.1} parent=23 // pred_check
          %p155 = pneg %p154
        $region30: #{tpu_custom_call.1} parent=23 // pred_check_branch
          %157 = sbr.rel (%p155) target = $region32
        $region31: #{tpu_custom_call.1} parent=23 // pred_region
          %vm158 = vcmask 7168
          %159 = vst.msk [vmem:[#allocation2] sm:$0xff] %vm158, 0.0
          %160 = vst.msk [vmem:[#allocation2 + $0x8] sm:$0xff] %vm158, 0.0
          %161 = vst.msk [vmem:[#allocation3] sm:$0xff] %vm158, -inf
          %162 = vst.msk [vmem:[#allocation3 + $0x8] sm:$0xff] %vm158, -inf
        $region32: #{tpu_custom_call.1} parent=23 // pred_fallthru
          _
        %v163 = vld [vmem:[%s129] sm:$0xff]
        %v164 = vld [vmem:[%s129 + $0x8] sm:$0xff]
        %v165 = vld [vmem:[%s129 + $0x10] sm:$0xff]
        %v166 = vld [vmem:[%s129 + $0x18] sm:$0xff]
        %v167 = vld [vmem:[#allocation2] sm:$0xff]
        %v168 = vld [vmem:[#allocation2 + $0x8] sm:$0xff]
        %v169 = vadd.f32 %v163, %v164
        %170 = vadd.xlane.f32.xlu0 %v169
        %v171 = vpop.xlane.xlu0 %170
        %v172 = vadd.f32 %v165, %v166
        %173 = vadd.xlane.f32.xlu0 %v172
        %v174 = vpop.xlane.xlu0 %173
        %v175 = vadd.f32 %v167, %v171
        %v176 = vadd.f32 %v168, %v174
        %vm177 = vcmask 7168
        %178 = vst.msk [vmem:[#allocation2] sm:$0xff] %vm177, %v175
        %179 = vst.msk [vmem:[#allocation2 + $0x8] sm:$0xff] %vm177, %v176
        %v180 = vld [vmem:[#allocation3] sm:$0xff]
        %v181 = vld [vmem:[#allocation3 + $0x8] sm:$0xff]
        %v182 = vmax.f32 %v163, %v164
        %183 = vmax.xlane.f32.xlu0 %v182
        %v184 = vpop.xlane.xlu0 %183
        %v185 = vmax.f32 %v165, %v166
        %186 = vmax.xlane.f32.xlu0 %v185
        %v187 = vpop.xlane.xlu0 %186
        %v188 = vmax.f32 %v180, %v184
        %v189 = vmax.f32 %v181, %v187
        %190 = vst.msk [vmem:[#allocation3] sm:$0xff] %vm177, %v188
        %191 = vst.msk [vmem:[#allocation3 + $0x8] sm:$0xff] %vm177, %v189
        // Predicated region
        $region33: #{tpu_custom_call.1} parent=23 // pred_check
          %p192 = pneg %p154
        $region34: #{tpu_custom_call.1} parent=23 // pred_check_branch
          %194 = sbr.rel (%p192) target = $region36
        $region35: #{tpu_custom_call.1} parent=23 // pred_region
          %v195 = vld [vmem:[#allocation2] sm:$0xff]
          %v196 = vld [vmem:[#allocation2 + $0x8] sm:$0xff]
          %197 = vst.msk [vmem:[%s153] sm:$0xff] %vm177, %v195
          %198 = vst.msk [vmem:[%s153 + $0x8] sm:$0xff] %vm177, %v196
          %v199 = vld [vmem:[#allocation3] sm:$0xff]
          %v200 = vld [vmem:[#allocation3 + $0x8] sm:$0xff]
          %203 = vrot.lane.b32.xlu0 %v199, 1
          %v204 = vpop.permute.xlu0 %203
          %205 = vrot.lane.b32.xlu0 %v200, 1
          %v206 = vpop.permute.xlu0 %205
          %vm209 = vcmask 15368
          %210 = vst.msk [vmem:[%s153] sm:$0xff] %vm209, %v204
          %211 = vst.msk [vmem:[%s153 + $0x8] sm:$0xff] %vm209, %v206
        $region36: #{tpu_custom_call.1} parent=23 // pred_fallthru
          _
        %p212 = scmp.lt.s32.totalorder %s19, 1
        %s213 = scalar_select %p212, %s19, 1
        %s214 = smul.addr %s213, 2
        %s215 = smul.addr %s214, 8
        %s216 = scalar_lea.vmem %s1, %s215
        // Predicated region
        $region37: #{tpu_custom_call.1} parent=23 // pred_check
          %p217 = pneg %p73
        $region38: #{tpu_custom_call.1} parent=23 // pred_check_branch
          %219 = sbr.rel (%p217) target = $region40
        $region39: #{tpu_custom_call.1} parent=23 // pred_region
          _
        $region40: #{tpu_custom_call.1} parent=23 // pred_fallthru
          _
      $region24: #{tpu_custom_call.1} parent=5 // pred_fallthru
        _
      %p220 = scmp.le.s32.totalorder 2, %s10
      // Predicated region
      $region41: #{tpu_custom_call.1} parent=5 // pred_check
        %p221 = pneg %p220
      $region42: #{tpu_custom_call.1} parent=5 // pred_check_branch
        %223 = sbr.rel (%p221) target = $region44
      $region43: #{tpu_custom_call.1} parent=5 // pred_region
        %s224 = ssub.s32 %s10, 2
        // Predicated region
        $region45: #{tpu_custom_call.1} parent=43 // pred_check
          %p225 = pneg %p79
        $region46: #{tpu_custom_call.1} parent=43 // pred_check_branch
          %227 = sbr.rel (%p225) target = $region48
        $region47: #{tpu_custom_call.1} parent=43 // pred_region
          %p228 = scmp.lt.s32.totalorder %s21, 1
          %s229 = scalar_select %p228, %s21, 1
          %s230 = smul.addr %s229, 2
          %s231 = smul.addr %s230, 8
          %s232 = scalar_lea.vmem %s1, %s231
        $region48: #{tpu_custom_call.1} parent=43 // pred_fallthru
          _
      $region44: #{tpu_custom_call.1} parent=5 // pred_fallthru
        _
    $region6: #{tpu_custom_call.1} parent=1 // loop_footer
      %s14 = sadd.s32 1, %s10
    $region7: #{tpu_custom_call.1} parent=1 // loop_footer_branch
      %9 = sbr.rel target = $region3
    $region8: #{tpu_custom_call.1} parent=1 // loop_exit
      _
    %233 = vsyncpa [#allocation5], 1
    %s234 = scalar_lea.sflag [#allocation5], 1
    %235 = vsyncpa %s234, 1

</llo_original>
